<compile_context>
chip_gen: v7x
topology: tpu7x:2x2x1
jax: 0.10.0
libtpu: 0.0.40
codegen_flags: <defaults>
</compile_context>

<pallas_src>
import functools

import jax
import jax.numpy as jnp
from jax import lax
from jax.experimental import pallas as pl
from jax.experimental.pallas import tpu as pltpu

LANES = 128          # hidden width padded to the TPU lane count
IN_LANES = 8         # padded input width: 3 features + constant-1 lane + 4 zero lanes
OUT_LANES = 8        # padded output width: 2 Q-values + 6 zero lanes
DIMS = [(3, 16), (16, 16), (16, 16), (16, 2)]   # (fan_in, fan_out) per layer


def _round_up(v, m):
    return (v + m - 1) // m * m


def dqn_kernel(x_ref, w0_ref, wmid_ref, w3_ref, o_ref):
    # x_ref:    (BM, 8)        activations; features in lanes 0..2, lanes 3..7 zero.
    # w0_ref:   (8, 128)       layer-0 slab (bias folded, ones-lane regen at [3, 16]).
    # wmid_ref: (2, 128, 128)  layer-1/2 slabs (bias folded, ones-lane regen at [16, 16]).
    # w3_ref:   (128, 8)       layer-3 slab (bias folded, no ReLU / no regen needed).
    # o_ref:    (BM, 8)        output; lanes 0..1 meaningful.
    compute_dtype = w0_ref.dtype
    x = x_ref[...]
    # Inject the constant-1 lane (lane 3) consumed by the ones-column bias fold.
    ones_lane = (lax.broadcasted_iota(jnp.int32, (1, IN_LANES), 1) == 3).astype(x.dtype)
    h = x + ones_lane

    # Layer 0: (BM, 8) @ (8, 128) -> f32 accumulate, ReLU in f32.
    h = jnp.dot(h, w0_ref[...], preferred_element_type=jnp.float32)
    h = jnp.maximum(h, 0.0)
    # Layers 1 and 2: (BM, 128) @ (128, 128).
    h = jnp.dot(h.astype(compute_dtype), wmid_ref[0], preferred_element_type=jnp.float32)
    h = jnp.maximum(h, 0.0)
    h = jnp.dot(h.astype(compute_dtype), wmid_ref[1], preferred_element_type=jnp.float32)
    h = jnp.maximum(h, 0.0)
    # Layer 3: (BM, 128) @ (128, 8) -> (BM, 8), no ReLU.
    o_ref[...] = jnp.dot(h.astype(compute_dtype), w3_ref[...],
                         preferred_element_type=jnp.float32).astype(o_ref.dtype)


def pack_params(params, dtype):
    """Fold the 4 (W, b) layers into exact-width, zero-padded slabs (ones-column trick)."""
    (w0, b0), (w1, b1), (w2, b2), (w3, b3) = [
        (jnp.asarray(w, jnp.float32), jnp.asarray(b, jnp.float32)) for w, b in params
    ]
    # Layer 0: W0 in rows 0..2, bias in row 3; [3, 16] = 1.0 regenerates the ones lane.
    s0 = jnp.zeros((IN_LANES, LANES), jnp.float32)
    s0 = s0.at[:3, :16].set(w0).at[3, :16].set(b0).at[3, 16].set(1.0)

    def mid_slab(w, b):
        s = jnp.zeros((LANES, LANES), jnp.float32)
        return s.at[:16, :16].set(w).at[16, :16].set(b).at[16, 16].set(1.0)

    s_mid = jnp.stack([mid_slab(w1, b1), mid_slab(w2, b2)])   # (2, 128, 128)

    # Layer 3: W3 in rows 0..15 / cols 0..1, bias in row 16 (no ReLU -> no regen needed).
    s3 = jnp.zeros((LANES, OUT_LANES), jnp.float32)
    s3 = s3.at[:16, :2].set(w3).at[16, :2].set(b3)
    return s0.astype(dtype), s_mid.astype(dtype), s3.astype(dtype)


@functools.partial(jax.jit, static_argnames=("block_batch", "use_bf16"))
def dq_network(x, params, *, block_batch=1024, use_bf16=True):
    """Fused DQNetwork forward. x: (B, 3) f32 -> (B, 2) f32."""
    B = x.shape[0]
    compute_dtype = jnp.bfloat16 if use_bf16 else jnp.float32

    # Adaptive batch tile: don't round a small B up to a mostly-padding tile, and keep
    # >= 2 grid steps (when possible) so v7x's 2 TensorCores both get work.
    rows = _round_up(max(B, 1), 8)
    BM = min(_round_up(max(block_batch, 8), 8), rows)
    if rows > 8:
        BM = min(BM, _round_up(pl.cdiv(rows, 2), 8))
    grid = pl.cdiv(rows, BM)
    B_pad = grid * BM

    # Single pad op: (B, 3) -> (B_pad, 8) in the compute dtype. The constant-1 lane is
    # injected inside the kernel, so no extra scatter ops over the padded array.
    x_pad = jnp.pad(x.astype(compute_dtype),
                    ((0, B_pad - B), (0, IN_LANES - x.shape[1])))

    w0, w_mid, w3 = pack_params(params, compute_dtype)

    itemsize = jnp.dtype(compute_dtype).itemsize
    flops = 2 * B_pad * (IN_LANES * LANES + 2 * LANES * LANES + LANES * OUT_LANES)
    bytes_accessed = (x_pad.size * itemsize
                      + (w0.size + w_mid.size + w3.size) * itemsize
                      + B_pad * OUT_LANES * 4)

    out = pl.pallas_call(
        dqn_kernel,
        out_shape=jax.ShapeDtypeStruct((B_pad, OUT_LANES), jnp.float32),
        grid_spec=pltpu.PrefetchScalarGridSpec(
            num_scalar_prefetch=0,
            grid=(grid,),
            in_specs=[
                pl.BlockSpec((BM, IN_LANES), lambda i: (i, 0)),       # activations (tiled)
                pl.BlockSpec((IN_LANES, LANES), lambda i: (0, 0)),    # layer-0 slab (resident)
                pl.BlockSpec((2, LANES, LANES), lambda i: (0, 0, 0)), # layer-1/2 slabs (resident)
                pl.BlockSpec((LANES, OUT_LANES), lambda i: (0, 0)),   # layer-3 slab (resident)
            ],
            out_specs=pl.BlockSpec((BM, OUT_LANES), lambda i: (i, 0)),
        ),
        compiler_params=pltpu.CompilerParams(
            dimension_semantics=("parallel",),   # megacore sharding on v7x; harmless elsewhere
        ),
        cost_estimate=pl.CostEstimate(
            flops=flops, transcendentals=0, bytes_accessed=bytes_accessed),
    )(x_pad, w0, w_mid, w3)

    return out[:B, :2]


def init_params(key):
    """Deterministic init matching nn.Linear (uniform +/- 1/sqrt(fan_in)).

    Weights stored [in, out] (y = x @ W + b, equivalent to PyTorch x @ W.T with W [out, in]).
    """
    params = []
    for fan_in, fan_out in DIMS:
        key, kw, kb = jax.random.split(key, 3)
        bound = 1.0 / jnp.sqrt(jnp.float32(fan_in))
        w = jax.random.uniform(kw, (fan_in, fan_out), jnp.float32, -bound, bound)
        b = jax.random.uniform(kb, (fan_out,), jnp.float32, -bound, bound)
        params.append((w, b))
    return params


def dq_network_ref(x, params):
    """Plain-JAX reference for correctness checking."""
    h = x
    for i, (w, b) in enumerate(params):
        h = h @ w + b
        if i < len(params) - 1:
            h = jnp.maximum(h, 0.0)
    return h


if __name__ == "__main__":
    key = jax.random.PRNGKey(0)
    kp, kx = jax.random.split(key)
    params = init_params(kp)

    # Small batch consistent with the module's (B, 3) input.
    x_small = jax.random.normal(kx, (4, 3), jnp.float32)
    out_small = jax.block_until_ready(dq_network(x_small, params))
    ref_small = dq_network_ref(x_small, params)
    assert out_small.shape == (4, 2), out_small.shape
    assert jnp.allclose(out_small, ref_small, atol=5e-2, rtol=5e-2), (out_small, ref_small)

    # Exercise the 2-step "parallel" grid plus ragged batch padding.
    x_big = jax.random.normal(jax.random.fold_in(kx, 1), (200, 3), jnp.float32)
    out_big = jax.block_until_ready(dq_network(x_big, params))
    ref_big = dq_network_ref(x_big, params)
    assert out_big.shape == (200, 2), out_big.shape
    assert jnp.allclose(out_big, ref_big, atol=5e-2, rtol=5e-2), (out_big, ref_big)

    # f32 operand path must match the reference tightly.
    out_f32 = jax.block_until_ready(dq_network(x_big, params, use_bf16=False))
    assert jnp.allclose(out_f32, ref_big, atol=1e-5, rtol=1e-5), (out_f32, ref_big)

    print("KERNEL_OK")
</pallas_src>

<mosaic_0001>
module attributes {stable_mosaic.version = 11 : i64} {
  func.func @dqn_kernel(%arg0: i32, %arg1: memref<8x8xbf16, #tpu.memory_space<vmem>>, %arg2: memref<8x128xbf16, #tpu.memory_space<vmem>>, %arg3: memref<2x128x128xbf16, #tpu.memory_space<vmem>>, %arg4: memref<128x8xbf16, #tpu.memory_space<vmem>>, %arg5: memref<8x8xf32, #tpu.memory_space<vmem>>) attributes {dimension_semantics = [#tpu.dimension_semantics<parallel>], iteration_bounds = array<i64: 1>, scalar_prefetch = 0 : i64, scratch_operands = 0 : i64, tpu.core_type = #tpu.core_type<tc>, window_params = [{transform_indices = @transform_0, window_bounds = array<i64: 8, 8>}, {pipeline_mode = #tpu.pipeline_mode<synchronous>, transform_indices = @transform_1, window_bounds = array<i64: 8, 128>}, {pipeline_mode = #tpu.pipeline_mode<synchronous>, transform_indices = @transform_2, window_bounds = array<i64: 2, 128, 128>}, {pipeline_mode = #tpu.pipeline_mode<synchronous>, transform_indices = @transform_3, window_bounds = array<i64: 128, 8>}, {transform_indices = @transform_4, window_bounds = array<i64: 8, 8>}]} {
    %c0 = arith.constant 0 : index
    %c0_0 = arith.constant 0 : index
    %0 = vector.load %arg1[%c0, %c0_0] : memref<8x8xbf16, #tpu.memory_space<vmem>>, vector<8x8xbf16>
    %1 = tpu.iota {dimensions = array<i32: 1>} : vector<1x8xi32>
    %c3_i32 = arith.constant 3 : i32
    %2 = vector.broadcast %c3_i32 : i32 to vector<1x8xi32>
    %3 = arith.cmpi eq, %1, %2 : vector<1x8xi32>
    %4 = arith.extui %3 : vector<1x8xi1> to vector<1x8xi32>
    %5 = arith.sitofp %4 : vector<1x8xi32> to vector<1x8xf32>
    %6 = arith.truncf %5 : vector<1x8xf32> to vector<1x8xbf16>
    %7 = vector.broadcast %6 : vector<1x8xbf16> to vector<8x8xbf16>
    %8 = arith.addf %0, %7 : vector<8x8xbf16>
    %c0_1 = arith.constant 0 : index
    %c0_2 = arith.constant 0 : index
    %9 = vector.load %arg2[%c0_1, %c0_2] : memref<8x128xbf16, #tpu.memory_space<vmem>>, vector<8x128xbf16>
    %cst = arith.constant dense<0.000000e+00> : vector<8x128xf32>
    %10 = tpu.matmul %8, %9, %cst {dimension_numbers = #tpu.dot_dimension_numbers<[1], [0], [0], [1], [0, 0, 1, 1], [], []>} : vector<8x8xbf16>, vector<8x128xbf16>, vector<8x128xf32> -> vector<8x128xf32>
    %cst_3 = arith.constant 0.000000e+00 : f32
    %11 = vector.broadcast %cst_3 : f32 to vector<8x128xf32>
    %12 = arith.maximumf %10, %11 : vector<8x128xf32>
    %13 = arith.truncf %12 : vector<8x128xf32> to vector<8x128xbf16>
    %c0_4 = arith.constant 0 : index
    %c0_5 = arith.constant 0 : index
    %c0_6 = arith.constant 0 : index
    %14 = vector.load %arg3[%c0_4, %c0_5, %c0_6] : memref<2x128x128xbf16, #tpu.memory_space<vmem>>, vector<1x128x128xbf16>
    %15 = vector.shape_cast %14 : vector<1x128x128xbf16> to vector<128x128xbf16>
    %cst_7 = arith.constant dense<0.000000e+00> : vector<8x128xf32>
    %16 = tpu.matmul %13, %15, %cst_7 {dimension_numbers = #tpu.dot_dimension_numbers<[1], [0], [0], [1], [0, 0, 1, 1], [], []>} : vector<8x128xbf16>, vector<128x128xbf16>, vector<8x128xf32> -> vector<8x128xf32>
    %cst_8 = arith.constant 0.000000e+00 : f32
    %17 = vector.broadcast %cst_8 : f32 to vector<8x128xf32>
    %18 = arith.maximumf %16, %17 : vector<8x128xf32>
    %19 = arith.truncf %18 : vector<8x128xf32> to vector<8x128xbf16>
    %c1 = arith.constant 1 : index
    %c0_9 = arith.constant 0 : index
    %c0_10 = arith.constant 0 : index
    %20 = vector.load %arg3[%c1, %c0_9, %c0_10] : memref<2x128x128xbf16, #tpu.memory_space<vmem>>, vector<1x128x128xbf16>
    %21 = vector.shape_cast %20 : vector<1x128x128xbf16> to vector<128x128xbf16>
    %cst_11 = arith.constant dense<0.000000e+00> : vector<8x128xf32>
    %22 = tpu.matmul %19, %21, %cst_11 {dimension_numbers = #tpu.dot_dimension_numbers<[1], [0], [0], [1], [0, 0, 1, 1], [], []>} : vector<8x128xbf16>, vector<128x128xbf16>, vector<8x128xf32> -> vector<8x128xf32>
    %cst_12 = arith.constant 0.000000e+00 : f32
    %23 = vector.broadcast %cst_12 : f32 to vector<8x128xf32>
    %24 = arith.maximumf %22, %23 : vector<8x128xf32>
    %25 = arith.truncf %24 : vector<8x128xf32> to vector<8x128xbf16>
    %c0_13 = arith.constant 0 : index
    %c0_14 = arith.constant 0 : index
    %26 = vector.load %arg4[%c0_13, %c0_14] : memref<128x8xbf16, #tpu.memory_space<vmem>>, vector<128x8xbf16>
    %cst_15 = arith.constant dense<0.000000e+00> : vector<8x8xf32>
    %27 = tpu.matmul %25, %26, %cst_15 {dimension_numbers = #tpu.dot_dimension_numbers<[1], [0], [0], [1], [0, 0, 1, 1], [], []>} : vector<8x128xbf16>, vector<128x8xbf16>, vector<8x8xf32> -> vector<8x8xf32>
    %c0_16 = arith.constant 0 : index
    %c0_17 = arith.constant 0 : index
    %28 = vector.load %arg5[%c0_16, %c0_17] : memref<8x8xf32, #tpu.memory_space<vmem>>, vector<8x8xf32>
    tpu.vector_store %arg5[%c0_16, %c0_17], %27 {strides = array<i32>} : memref<8x8xf32, #tpu.memory_space<vmem>>, vector<8x8xf32>,
    return
  }
  func.func @transform_0(%arg0: i32) -> (i32, i32) {
    %c0_i32 = arith.constant 0 : i32
    %c0_i32_0 = arith.constant 0 : i32
    return %arg0, %c0_i32 : i32, i32
  }
  func.func @transform_1(%arg0: i32) -> (i32, i32) {
    %c0_i32 = arith.constant 0 : i32
    %c0_i32_0 = arith.constant 0 : i32
    %c0_i32_1 = arith.constant 0 : i32
    return %c0_i32, %c0_i32_0 : i32, i32
  }
  func.func @transform_2(%arg0: i32) -> (i32, i32, i32) {
    %c0_i32 = arith.constant 0 : i32
    %c0_i32_0 = arith.constant 0 : i32
    %c0_i32_1 = arith.constant 0 : i32
    %c0_i32_2 = arith.constant 0 : i32
    return %c0_i32, %c0_i32_0, %c0_i32_1 : i32, i32, i32
  }
  func.func @transform_3(%arg0: i32) -> (i32, i32) {
    %c0_i32 = arith.constant 0 : i32
    %c0_i32_0 = arith.constant 0 : i32
    %c0_i32_1 = arith.constant 0 : i32
    return %c0_i32, %c0_i32_0 : i32, i32
  }
  func.func @transform_4(%arg0: i32) -> (i32, i32) {
    %c0_i32 = arith.constant 0 : i32
    %c0_i32_0 = arith.constant 0 : i32
    return %arg0, %c0_i32 : i32, i32
  }
}

</mosaic_0001>

<llo_original>
// kernel: dq_network.1
$region0: #{dq_network.1}
  #allocation0 [shape = 'u32[]', space=smem, size = 0x4, offset = 0x4, fixed_abs, tag = 'smem constant byte address 0x4 - core index']
  #allocation1 [shape = 'u32[144,128]{1,0:T(1,128)}', space=vmem, size = 0x12000, scoped, tag = 'internal scratch']
  %s0 = inlined_call_operand.vmem [shape: bf16[8,8], index: 0, kind: input, shape index: {}]
  %s1 = inlined_call_operand.vmem [shape: bf16[8,128], index: 1, kind: input, shape index: {}]
  %s2 = inlined_call_operand.vmem [shape: bf16[2,128,128], index: 2, kind: input, shape index: {}]
  %s3 = inlined_call_operand.vmem [shape: bf16[128,8], index: 3, kind: input, shape index: {}]
  %s4 = inlined_call_operand.vmem [shape: f32[8,8], index: 4, kind: output, shape index: {}]
  %s5 = sld [smem:[#allocation0]]
  $region26: #{dq_network.1} parent=0
    _
  %s7 = ssub.s32 1, %s5
  %s8 = scalar_select 0, %s7, %s5
  // Predicated region
  $region2: #{dq_network.1} parent=0 // pred_check
    _
  $region3: #{dq_network.1} parent=0 // pred_check_branch
    %10 = sbr.rel (0) target = $region5
  $region4: #{dq_network.1} parent=0 // pred_region
    _
  $region5: #{dq_network.1} parent=0 // pred_fallthru
    _
  // Predicated region
  $region6: #{dq_network.1} parent=0 // pred_check
    _
  $region7: #{dq_network.1} parent=0 // pred_check_branch
    %12 = sbr.rel (0) target = $region9
  $region8: #{dq_network.1} parent=0 // pred_region
    _
  $region9: #{dq_network.1} parent=0 // pred_fallthru
    _
  // Predicated region
  $region10: #{dq_network.1} parent=0 // pred_check
    _
  $region11: #{dq_network.1} parent=0 // pred_check_branch
    %14 = sbr.rel (0) target = $region13
  $region12: #{dq_network.1} parent=0 // pred_region
    _
  $region13: #{dq_network.1} parent=0 // pred_fallthru
    _
  // Predicated region
  $region14: #{dq_network.1} parent=0 // pred_check
    _
  $region15: #{dq_network.1} parent=0 // pred_check_branch
    %16 = sbr.rel (0) target = $region17
  $region16: #{dq_network.1} parent=0 // pred_region
    _
  $region17: #{dq_network.1} parent=0 // pred_fallthru
    _
  %v18 = vld [vmem:[%s0] sm:$0xf]
  %v19 = vlaneseq
  %v20 = vand.u32 %v19, 127
  %vm21 = vcmp.eq.s32.totalorder %v20, 3
  %v22 = vsel %vm21, 1, 0
  %v23 = vcvt.s32.f32 %v22
  %v24 = vpack.c.bf16 %v23, %v23
  %v25 = vadd.bf16 %v18, %v24
  %v26 = vld [vmem:[%s1] sm:$0xf]
  %vm27 = vcmask 64512
  %v29 = vsel %vm27, %v25, 0
  %vm31 = vcmask 1043456
  %v33 = vsel %vm31, %v26, 0
  %35 = vmatprep.subr.bf16.mxu0 0
  %36 = vmatpush1.bf16.msra.mxu0 %v33
  %37 = vmatprep.subr.bf16.mxu0 0
  %38 = vmatpush1.bf16.msra.mxu0 0
  %39 = vmatprep.subr.bf16.mxu0 0
  %40 = vmatpush1.bf16.msra.mxu0 0
  %41 = vmatprep.subr.bf16.mxu0 0
  %42 = vmatpush1.bf16.msra.mxu0 0
  %43 = vmatprep.subr.bf16.mxu0 0
  %44 = vmatpush1.bf16.msra.mxu0 0
  %45 = vmatprep.subr.bf16.mxu0 0
  %46 = vmatpush1.bf16.msra.mxu0 0
  %47 = vmatprep.subr.bf16.mxu0 0
  %48 = vmatpush1.bf16.msra.mxu0 0
  %49 = vmatprep.subr.bf16.mxu0 0
  %50 = vmatpush1.bf16.msra.mxu0 0
  %51 = vmatprep.subr.bf16.mxu0 0
  %52 = vmatpush1.bf16.msra.mxu0 0
  %53 = vmatprep.subr.bf16.mxu0 0
  %54 = vmatpush1.bf16.msra.mxu0 0
  %55 = vmatprep.subr.bf16.mxu0 0
  %56 = vmatpush1.bf16.msra.mxu0 0
  %57 = vmatprep.subr.bf16.mxu0 0
  %58 = vmatpush1.bf16.msra.mxu0 0
  %59 = vmatprep.subr.bf16.mxu0 0
  %60 = vmatpush1.bf16.msra.mxu0 0
  %61 = vmatprep.subr.bf16.mxu0 0
  %62 = vmatpush1.bf16.msra.mxu0 0
  %63 = vmatprep.subr.bf16.mxu0 0
  %64 = vmatpush1.bf16.msra.mxu0 0
  %65 = vmatprep.subr.bf16.mxu0 0
  %66 = vmatpush1.bf16.msra.mxu0 0
  %67 = vmatprep.mubr.bf16.mxu0 0
  %68 = vmatmul.mubr.bf16.gmra.mrb[0].mxu0 %v29
  %v69 = vpop.f32.mrb[0].mxu0
  %v70 = vadd.f32 0.0, %v69
  %v71 = vpop.f32.mrb[0].mxu0
  %v72 = vpop.f32.mrb[0].mxu0
  %v73 = vpop.f32.mrb[0].mxu0
  %74 = vdwg.mxu0
  %v75 = vmax.f32 %v70, 0.0
  %v76 = vpack.c.bf16 %v75, %v75
  %v77 = vld [vmem:[%s2] sm:$0xf]
  %v78 = vld [vmem:[%s2 + $0x4] sm:$0xf]
  %v79 = vld [vmem:[%s2 + $0x8] sm:$0xf]
  %v80 = vld [vmem:[%s2 + $0xc] sm:$0xf]
  %v81 = vld [vmem:[%s2 + $0x10] sm:$0xf]
  %v82 = vld [vmem:[%s2 + $0x14] sm:$0xf]
  %v83 = vld [vmem:[%s2 + $0x18] sm:$0xf]
  %v84 = vld [vmem:[%s2 + $0x1c] sm:$0xf]
  %v85 = vld [vmem:[%s2 + $0x20] sm:$0xf]
  %v86 = vld [vmem:[%s2 + $0x24] sm:$0xf]
  %v87 = vld [vmem:[%s2 + $0x28] sm:$0xf]
  %v88 = vld [vmem:[%s2 + $0x2c] sm:$0xf]
  %v89 = vld [vmem:[%s2 + $0x30] sm:$0xf]
  %v90 = vld [vmem:[%s2 + $0x34] sm:$0xf]
  %v91 = vld [vmem:[%s2 + $0x38] sm:$0xf]
  %v92 = vld [vmem:[%s2 + $0x3c] sm:$0xf]
  %v109 = vunpack.c.l.b16 %v77
  %v110 = vunpack.c.l.b16 %v78
  %v111 = vunpack.c.l.b16 %v79
  %v112 = vunpack.c.l.b16 %v80
  %v113 = vunpack.c.l.b16 %v81
  %v114 = vunpack.c.l.b16 %v82
  %v115 = vunpack.c.l.b16 %v83
  %v116 = vunpack.c.l.b16 %v84
  %v117 = vunpack.c.l.b16 %v85
  %v118 = vunpack.c.l.b16 %v86
  %v119 = vunpack.c.l.b16 %v87
  %v120 = vunpack.c.l.b16 %v88
  %v121 = vunpack.c.l.b16 %v89
  %v122 = vunpack.c.l.b16 %v90
  %v123 = vunpack.c.l.b16 %v91
  %v124 = vunpack.c.l.b16 %v92
  %v125 = vpack.c.b16 %v110, %v109
  %v126 = vpack.c.b16 %v112, %v111
  %v127 = vpack.c.b16 %v114, %v113
  %v128 = vpack.c.b16 %v116, %v115
  %v129 = vpack.c.b16 %v118, %v117
  %v130 = vpack.c.b16 %v120, %v119
  %v131 = vpack.c.b16 %v122, %v121
  %v132 = vpack.c.b16 %v124, %v123
  %141 = vmatprep.subr.bf16.mxu0 0
  %142 = vmatpush1.bf16.msra.mxu0 %v125
  %143 = vmatprep.subr.bf16.mxu0 0
  %144 = vmatpush1.bf16.msra.mxu0 %v126
  %145 = vmatprep.subr.bf16.mxu0 0
  %146 = vmatpush1.bf16.msra.mxu0 %v127
  %147 = vmatprep.subr.bf16.mxu0 0
  %148 = vmatpush1.bf16.msra.mxu0 %v128
  %149 = vmatprep.subr.bf16.mxu0 0
  %150 = vmatpush1.bf16.msra.mxu0 %v129
  %151 = vmatprep.subr.bf16.mxu0 0
  %152 = vmatpush1.bf16.msra.mxu0 %v130
  %153 = vmatprep.subr.bf16.mxu0 0
  %154 = vmatpush1.bf16.msra.mxu0 %v131
  %155 = vmatprep.subr.bf16.mxu0 0
  %156 = vmatpush1.bf16.msra.mxu0 %v132
  %157 = vmatprep.subr.bf16.mxu0 0
  %158 = vmatpush1.bf16.msra.mxu0 0
  %159 = vmatprep.subr.bf16.mxu0 0
  %160 = vmatpush1.bf16.msra.mxu0 0
  %161 = vmatprep.subr.bf16.mxu0 0
  %162 = vmatpush1.bf16.msra.mxu0 0
  %163 = vmatprep.subr.bf16.mxu0 0
  %164 = vmatpush1.bf16.msra.mxu0 0
  %165 = vmatprep.subr.bf16.mxu0 0
  %166 = vmatpush1.bf16.msra.mxu0 0
  %167 = vmatprep.subr.bf16.mxu0 0
  %168 = vmatpush1.bf16.msra.mxu0 0
  %169 = vmatprep.subr.bf16.mxu0 0
  %170 = vmatpush1.bf16.msra.mxu0 0
  %171 = vmatprep.subr.bf16.mxu0 0
  %172 = vmatpush1.bf16.msra.mxu0 0
  %173 = vmatprep.mubr.bf16.mxu0 0
  %174 = vmatmul.mubr.bf16.gmra.mrb[0].mxu0 %v76
  %v175 = vpop.f32.mrb[0].mxu0
  %v176 = vadd.f32 0.0, %v175
  %v177 = vpop.f32.mrb[0].mxu0
  %v178 = vpop.f32.mrb[0].mxu0
  %v179 = vpop.f32.mrb[0].mxu0
  %180 = vdwg.mxu0
  %v181 = vmax.f32 %v176, 0.0
  %v182 = vpack.c.bf16 %v181, %v181
  %s183 = scalar_lea.vmem %s2, 64
  %v184 = vld [vmem:[%s183] sm:$0xf]
  %v185 = vld [vmem:[%s183 + $0x4] sm:$0xf]
  %v186 = vld [vmem:[%s183 + $0x8] sm:$0xf]
  %v187 = vld [vmem:[%s183 + $0xc] sm:$0xf]
  %v188 = vld [vmem:[%s183 + $0x10] sm:$0xf]
  %v189 = vld [vmem:[%s183 + $0x14] sm:$0xf]
  %v190 = vld [vmem:[%s183 + $0x18] sm:$0xf]
  %v191 = vld [vmem:[%s183 + $0x1c] sm:$0xf]
  %v192 = vld [vmem:[%s183 + $0x20] sm:$0xf]
  %v193 = vld [vmem:[%s183 + $0x24] sm:$0xf]
  %v194 = vld [vmem:[%s183 + $0x28] sm:$0xf]
  %v195 = vld [vmem:[%s183 + $0x2c] sm:$0xf]
  %v196 = vld [vmem:[%s183 + $0x30] sm:$0xf]
  %v197 = vld [vmem:[%s183 + $0x34] sm:$0xf]
  %v198 = vld [vmem:[%s183 + $0x38] sm:$0xf]
  %v199 = vld [vmem:[%s183 + $0x3c] sm:$0xf]
  %v216 = vunpack.c.l.b16 %v184
  %v217 = vunpack.c.l.b16 %v185
  %v218 = vunpack.c.l.b16 %v186
  %v219 = vunpack.c.l.b16 %v187
  %v220 = vunpack.c.l.b16 %v188
  %v221 = vunpack.c.l.b16 %v189
  %v222 = vunpack.c.l.b16 %v190
  %v223 = vunpack.c.l.b16 %v191
  %v224 = vunpack.c.l.b16 %v192
  %v225 = vunpack.c.l.b16 %v193
  %v226 = vunpack.c.l.b16 %v194
  %v227 = vunpack.c.l.b16 %v195
  %v228 = vunpack.c.l.b16 %v196
  %v229 = vunpack.c.l.b16 %v197
  %v230 = vunpack.c.l.b16 %v198
  %v231 = vunpack.c.l.b16 %v199
  %v232 = vpack.c.b16 %v217, %v216
  %v233 = vpack.c.b16 %v219, %v218
  %v234 = vpack.c.b16 %v221, %v220
  %v235 = vpack.c.b16 %v223, %v222
  %v236 = vpack.c.b16 %v225, %v224
  %v237 = vpack.c.b16 %v227, %v226
  %v238 = vpack.c.b16 %v229, %v228
  %v239 = vpack.c.b16 %v231, %v230
  %248 = vmatprep.subr.bf16.mxu0 0
  %249 = vmatpush1.bf16.msra.mxu0 %v232
  %250 = vmatprep.subr.bf16.mxu0 0
  %251 = vmatpush1.bf16.msra.mxu0 %v233
  %252 = vmatprep.subr.bf16.mxu0 0
  %253 = vmatpush1.bf16.msra.mxu0 %v234
  %254 = vmatprep.subr.bf16.mxu0 0
  %255 = vmatpush1.bf16.msra.mxu0 %v235
  %256 = vmatprep.subr.bf16.mxu0 0
  %257 = vmatpush1.bf16.msra.mxu0 %v236
  %258 = vmatprep.subr.bf16.mxu0 0
  %259 = vmatpush1.bf16.msra.mxu0 %v237
  %260 = vmatprep.subr.bf16.mxu0 0
  %261 = vmatpush1.bf16.msra.mxu0 %v238
  %262 = vmatprep.subr.bf16.mxu0 0
  %263 = vmatpush1.bf16.msra.mxu0 %v239
  %264 = vmatprep.subr.bf16.mxu0 0
  %265 = vmatpush1.bf16.msra.mxu0 0
  %266 = vmatprep.subr.bf16.mxu0 0
  %267 = vmatpush1.bf16.msra.mxu0 0
  %268 = vmatprep.subr.bf16.mxu0 0
  %269 = vmatpush1.bf16.msra.mxu0 0
  %270 = vmatprep.subr.bf16.mxu0 0
  %271 = vmatpush1.bf16.msra.mxu0 0
  %272 = vmatprep.subr.bf16.mxu0 0
  %273 = vmatpush1.bf16.msra.mxu0 0
  %274 = vmatprep.subr.bf16.mxu0 0
  %275 = vmatpush1.bf16.msra.mxu0 0
  %276 = vmatprep.subr.bf16.mxu0 0
  %277 = vmatpush1.bf16.msra.mxu0 0
  %278 = vmatprep.subr.bf16.mxu0 0
  %279 = vmatpush1.bf16.msra.mxu0 0
  %280 = vmatprep.mubr.bf16.mxu0 0
  %281 = vmatmul.mubr.bf16.gmra.mrb[0].mxu0 %v182
  %v282 = vpop.f32.mrb[0].mxu0
  %v283 = vadd.f32 0.0, %v282
  %v284 = vpop.f32.mrb[0].mxu0
  %v285 = vpop.f32.mrb[0].mxu0
  %v286 = vpop.f32.mrb[0].mxu0
  %287 = vdwg.mxu0
  %v288 = vmax.f32 %v283, 0.0
  %v289 = vpack.c.bf16 %v288, %v288
  %v290 = vld [vmem:[%s3] sm:$0xf]
  %v291 = vld [vmem:[%s3 + $0x4] sm:$0xf]
  %v292 = vld [vmem:[%s3 + $0x8] sm:$0xf]
  %v293 = vld [vmem:[%s3 + $0xc] sm:$0xf]
  %v294 = vld [vmem:[%s3 + $0x10] sm:$0xf]
  %v295 = vld [vmem:[%s3 + $0x14] sm:$0xf]
  %v296 = vld [vmem:[%s3 + $0x18] sm:$0xf]
  %v297 = vld [vmem:[%s3 + $0x1c] sm:$0xf]
  %v298 = vld [vmem:[%s3 + $0x20] sm:$0xf]
  %v299 = vld [vmem:[%s3 + $0x24] sm:$0xf]
  %v300 = vld [vmem:[%s3 + $0x28] sm:$0xf]
  %v301 = vld [vmem:[%s3 + $0x2c] sm:$0xf]
  %v302 = vld [vmem:[%s3 + $0x30] sm:$0xf]
  %v303 = vld [vmem:[%s3 + $0x34] sm:$0xf]
  %v304 = vld [vmem:[%s3 + $0x38] sm:$0xf]
  %v305 = vld [vmem:[%s3 + $0x3c] sm:$0xf]
  %v322 = vunpack.c.l.b16 %v290
  %v323 = vunpack.c.l.b16 %v291
  %v324 = vunpack.c.l.b16 %v292
  %v325 = vunpack.c.l.b16 %v293
  %v326 = vunpack.c.l.b16 %v294
  %v327 = vunpack.c.l.b16 %v295
  %v328 = vunpack.c.l.b16 %v296
  %v329 = vunpack.c.l.b16 %v297
  %v330 = vunpack.c.l.b16 %v298
  %v331 = vunpack.c.l.b16 %v299
  %v332 = vunpack.c.l.b16 %v300
  %v333 = vunpack.c.l.b16 %v301
  %v334 = vunpack.c.l.b16 %v302
  %v335 = vunpack.c.l.b16 %v303
  %v336 = vunpack.c.l.b16 %v304
  %v337 = vunpack.c.l.b16 %v305
  %v338 = vpack.c.b16 %v323, %v322
  %v339 = vpack.c.b16 %v325, %v324
  %v340 = vpack.c.b16 %v327, %v326
  %v341 = vpack.c.b16 %v329, %v328
  %v342 = vpack.c.b16 %v331, %v330
  %v343 = vpack.c.b16 %v333, %v332
  %v344 = vpack.c.b16 %v335, %v334
  %v345 = vpack.c.b16 %v337, %v336
  %354 = vmatprep.subr.bf16.mxu0 0
  %355 = vmatpush1.bf16.msra.mxu0 %v338
  %356 = vmatprep.subr.bf16.mxu0 0
  %357 = vmatpush1.bf16.msra.mxu0 %v339
  %358 = vmatprep.subr.bf16.mxu0 0
  %359 = vmatpush1.bf16.msra.mxu0 %v340
  %360 = vmatprep.subr.bf16.mxu0 0
  %361 = vmatpush1.bf16.msra.mxu0 %v341
  %362 = vmatprep.subr.bf16.mxu0 0
  %363 = vmatpush1.bf16.msra.mxu0 %v342
  %364 = vmatprep.subr.bf16.mxu0 0
  %365 = vmatpush1.bf16.msra.mxu0 %v343
  %366 = vmatprep.subr.bf16.mxu0 0
  %367 = vmatpush1.bf16.msra.mxu0 %v344
  %368 = vmatprep.subr.bf16.mxu0 0
  %369 = vmatpush1.bf16.msra.mxu0 %v345
  %370 = vmatprep.subr.bf16.mxu0 0
  %371 = vmatpush1.bf16.msra.mxu0 0
  %372 = vmatprep.subr.bf16.mxu0 0
  %373 = vmatpush1.bf16.msra.mxu0 0
  %374 = vmatprep.subr.bf16.mxu0 0
  %375 = vmatpush1.bf16.msra.mxu0 0
  %376 = vmatprep.subr.bf16.mxu0 0
  %377 = vmatpush1.bf16.msra.mxu0 0
  %378 = vmatprep.subr.bf16.mxu0 0
  %379 = vmatpush1.bf16.msra.mxu0 0
  %380 = vmatprep.subr.bf16.mxu0 0
  %381 = vmatpush1.bf16.msra.mxu0 0
  %382 = vmatprep.subr.bf16.mxu0 0
  %383 = vmatpush1.bf16.msra.mxu0 0
  %384 = vmatprep.subr.bf16.mxu0 0
  %385 = vmatpush1.bf16.msra.mxu0 0
  %386 = vmatprep.mubr.bf16.mxu0 0
  %387 = vmatmul.mubr.bf16.gmra.mrb[0].mxu0 %v289
  %v388 = vpop.f32.mrb[0].mxu0
  %v389 = vadd.f32 0.0, %v388
  %v390 = vpop.f32.mrb[0].mxu0
  %v391 = vpop.f32.mrb[0].mxu0
  %v392 = vpop.f32.mrb[0].mxu0
  %393 = vdwg.mxu0
  %394 = vst.msk [vmem:[%s4] sm:$0xff] %vm27, %v389
  // Predicated region
  $region18: #{dq_network.1} parent=0 // pred_check
    _
  $region19: #{dq_network.1} parent=0 // pred_check_branch
    %396 = sbr.rel (0) target = $region21
  $region20: #{dq_network.1} parent=0 // pred_region
    _
  $region21: #{dq_network.1} parent=0 // pred_fallthru
    _
  // Predicated region
  $region22: #{dq_network.1} parent=0 // pred_check
    _
  $region23: #{dq_network.1} parent=0 // pred_check_branch
    %398 = sbr.rel (0) target = $region25
  $region24: #{dq_network.1} parent=0 // pred_region
    _
  $region25: #{dq_network.1} parent=0 // pred_fallthru
    _

</llo_original>
